<compile_context>
chip_gen: v5e
topology: v5e:2x2
jax: 0.10.0
libtpu: 0.0.40
codegen_flags: <defaults>
</compile_context>

<pallas_src>
import functools
import math

import jax
import jax.numpy as jnp
from jax import lax
from jax.experimental import pallas as pl
from jax.experimental.pallas import tpu as pltpu


def _masked_head_kernel(x_full_ref, x_kv_ref, wq_ref, wkv_ref,
                        out_ref, attn_ref, q_scr,
                        *, matmul_dtype, approx_recip):
    bb, T, TK = attn_ref.shape
    Hp = out_ref.shape[-1]            # head_dim zero-padded to a lane multiple
    C = x_full_ref.shape[-1]

    kidx = pl.program_id(1)           # key-tile index (inner, "arbitrary")
    koff = kidx * TK                  # global key offset of this tile

    # ---- q projection: once per batch block (key axis is the inner loop).
    # The C**-0.5 score scale is folded into wq in the wrapper.
    @pl.when(kidx == 0)
    def _():
        xq = x_full_ref[...].reshape(bb * T, C)
        q = jnp.dot(xq, wq_ref[...], preferred_element_type=jnp.float32)
        q_scr[...] = q.reshape(bb, T, Hp).astype(matmul_dtype)

    # ---- k / v projection for this key tile only (fused (C, 2*Hp) weight);
    # slices land on 128-lane boundaries, so no relayout copies.
    xkv = x_kv_ref[...].reshape(bb * TK, C)
    kv = jnp.dot(xkv, wkv_ref[...],
                 preferred_element_type=jnp.float32).astype(matmul_dtype)
    kmat = kv[:, :Hp].reshape(bb, TK, Hp)
    vmat = kv[:, Hp:].reshape(bb, TK, Hp)

    # ---- scores for this key tile: (bb, T, TK); contract the padded head
    # axis directly (no k^T materialization).
    s = lax.dot_general(q_scr[...], kmat,
                        dimension_numbers=(((2,), (2,)), ((0,), (0,))),
                        preferred_element_type=jnp.float32)

    # ---- causal mask built in-kernel for this key tile (VPU work that hides
    # under the MXU); no (T, T) mask tensor in HBM or VMEM.
    row = lax.broadcasted_iota(jnp.int32, (bb, T, TK), 1)
    col = lax.broadcasted_iota(jnp.int32, (bb, T, TK), 2) + koff
    s = jnp.where(col > row, -jnp.inf, s)

    # ---- softmax over dim=1 (the *query* axis), exactly as in the reference.
    # Each key column normalizes independently -> key tiling is reduction-free.
    # Elementwise math stays fp32 on all generations.
    m = jnp.max(s, axis=1, keepdims=True)
    p = jnp.exp(s - m)
    denom = jnp.sum(p, axis=1, keepdims=True)
    w = p * pl.reciprocal(denom, approx=approx_recip)
    attn_ref[...] = w                    # lane-dense writeback when TK >= 128

    # ---- output contribution of this key tile, accumulated into the fp32
    # (bb, T, Hp) output block which stays resident across the key axis.
    # Hp = 128 lanes keeps this store unmasked / lane-dense.
    contrib = lax.dot_general(w.astype(matmul_dtype), vmat,
                              dimension_numbers=(((2,), (1,)), ((0,), (0,))),
                              preferred_element_type=jnp.float32)

    @pl.when(kidx == 0)
    def _():
        out_ref[...] = contrib

    @pl.when(kidx > 0)
    def _():
        out_ref[...] += contrib


def _vmem_capacity_bytes():
    """Per-core VMEM capacity; conservative fallback if the query fails."""
    try:
        return int(pltpu.get_tpu_info().vmem_capacity_bytes)
    except Exception:
        return 64 * 1024 * 1024      # v7x per-TensorCore VMEM (smallest case)


def _estimate_vmem_bytes(bb, T, TK, C, Hp, in_itemsize, mm_itemsize):
    """Rough per-step working-set model (pipelined blocks + temporaries)."""
    est = 0
    # Pipelined blocks (double-buffered by default).
    est += 2 * bb * T * C * in_itemsize            # x, full query range
    est += 2 * bb * TK * C * in_itemsize           # x, key tile
    est += 2 * C * 3 * Hp * in_itemsize            # wq + fused wk|wv
    est += 2 * bb * T * Hp * 4                     # padded out block (fp32)
    est += 2 * bb * T * TK * 4                     # attn block (fp32)
    # Scratch + major in-kernel temporaries.
    est += bb * T * Hp * mm_itemsize               # q scratch
    est += 3 * bb * T * TK * 4                     # s / p / w (fp32)
    est += bb * T * TK * mm_itemsize               # matmul-dtype copy of w
    est += 3 * bb * TK * Hp * mm_itemsize          # kv / k / v tiles
    est += bb * T * Hp * 4                         # contrib
    return est


def _pick_tiles(B, T, C, Hp, in_itemsize, mm_itemsize, budget_bytes):
    """Pick (bb, TK): prefer large key tiles, then the largest batch block."""
    if T % 128 == 0:
        tk_cands = [c for c in (1024, 512, 256, 128) if c <= T and T % c == 0] or [T]
    else:
        tk_cands = [T]
    # Keep >= 2 steps along the "parallel" batch axis when B >= 2 so both
    # TensorCores on megacore parts (v7x) get work.
    bb_cap = B if B == 1 else max(1, B // 2)
    for tk in tk_cands:
        for bb in range(bb_cap, 0, -1):
            if B % bb:
                continue
            if _estimate_vmem_bytes(bb, T, tk, C, Hp,
                                    in_itemsize, mm_itemsize) <= budget_bytes:
                return bb, tk
    return 1, tk_cands[-1]


def masked_head(x, wq, wk, wv, *, precise=False):
    """x: (B, T, C); wq/wk/wv: (head_dim, C) in PyTorch nn.Linear convention.

    Returns (output, attn_weights) matching the PyTorch module's
    mask-is-not-None path (causal mask, softmax over dim=1).
    precise=True  -> fp32 MXU operands + exact reciprocal (matches fp32 ref).
    precise=False -> bf16 MXU operands (fp32 accumulation) + approx reciprocal.
    """
    B, T, C = x.shape
    H = wq.shape[0]
    Hp = 128 * ((H + 127) // 128)        # pad head dim to full lane width(s)
    scale = float(C) ** (-0.5)

    in_dtype = jnp.float32 if precise else jnp.bfloat16
    matmul_dtype = in_dtype
    in_itemsize = jnp.dtype(in_dtype).itemsize
    mm_itemsize = jnp.dtype(matmul_dtype).itemsize

    # Pre-transposed, zero-padded weights; scale folded into W_q; W_k|W_v fused.
    wq_p = jnp.zeros((C, Hp), in_dtype).at[:, :H].set((wq.T * scale).astype(in_dtype))
    wk_p = jnp.zeros((C, Hp), in_dtype).at[:, :H].set(wk.T.astype(in_dtype))
    wv_p = jnp.zeros((C, Hp), in_dtype).at[:, :H].set(wv.T.astype(in_dtype))
    wkv_p = jnp.concatenate([wk_p, wv_p], axis=1)            # (C, 2*Hp)

    # Generation-aware VMEM budget: the same number drives the tile picker and
    # the compiler limit (~75% of physical, with headroom for temporaries).
    vmem_cap = _vmem_capacity_bytes()
    vmem_limit = max(32 * 1024 * 1024, min((vmem_cap * 3) // 4, 96 * 1024 * 1024))
    picker_budget = (vmem_limit * 3) // 4
    bb, tk = _pick_tiles(B, T, C, Hp, in_itemsize, mm_itemsize, picker_budget)

    x_in = x.astype(in_dtype)

    cost = pl.CostEstimate(
        flops=2 * B * T * C * 3 * Hp + 2 * 2 * B * T * T * Hp,
        transcendentals=B * T * T,
        bytes_accessed=(2 * B * T * C * in_itemsize + C * 3 * Hp * in_itemsize
                        + B * T * Hp * 4 + B * T * T * 4),
    )

    kernel = functools.partial(
        _masked_head_kernel,
        matmul_dtype=matmul_dtype,
        approx_recip=not precise)

    out_pad, attn = pl.pallas_call(
        kernel,
        out_shape=(
            jax.ShapeDtypeStruct((B, T, Hp), jnp.float32),   # padded output
            jax.ShapeDtypeStruct((B, T, T), jnp.float32),    # attn weights
        ),
        grid_spec=pltpu.PrefetchScalarGridSpec(
            num_scalar_prefetch=0,
            grid=(B // bb, T // tk),
            in_specs=[
                pl.BlockSpec((bb, T, C), lambda b, k: (b, 0, 0)),   # x (q rows)
                pl.BlockSpec((bb, tk, C), lambda b, k: (b, k, 0)),  # x (key tile)
                pl.BlockSpec((C, Hp), lambda b, k: (0, 0)),         # W_q (scaled, padded)
                pl.BlockSpec((C, 2 * Hp), lambda b, k: (0, 0)),     # W_k|W_v (padded)
            ],
            out_specs=(
                pl.BlockSpec((bb, T, Hp), lambda b, k: (b, 0, 0)),  # out (acc over k)
                pl.BlockSpec((bb, T, tk), lambda b, k: (b, 0, k)),  # attn[:, :, k_tile]
            ),
            scratch_shapes=[pltpu.VMEM((bb, T, Hp), matmul_dtype)],  # q scratch
        ),
        compiler_params=pltpu.CompilerParams(
            dimension_semantics=("parallel", "arbitrary"),
            vmem_limit_bytes=int(vmem_limit),
        ),
        cost_estimate=cost,
    )(x_in, x_in, wq_p, wkv_p)

    return out_pad[:, :, :H], attn


def masked_head_reference(x, wq, wk, wv):
    """Pure-JAX reference mirroring the PyTorch forward (mask != None path)."""
    B, T, C = x.shape
    q = x @ wq.T
    k = x @ wk.T
    v = x @ wv.T
    s = jnp.einsum("btd,bsd->bts", q, k) * (C ** -0.5)
    row = lax.broadcasted_iota(jnp.int32, (T, T), 0)
    col = lax.broadcasted_iota(jnp.int32, (T, T), 1)
    s = jnp.where((col > row)[None, :, :], -jnp.inf, s)
    w = jax.nn.softmax(s, axis=1)          # dim=1 (query axis), as in the module
    out = jnp.einsum("bts,bsd->btd", w, v)
    return out, w


if __name__ == "__main__":
    # d_model = n_embd = 64, as in the PyTorch module.
    B, T, C = 2, 8, 64
    head_dim = 16

    key = jax.random.PRNGKey(0)
    kx, kq, kk, kv = jax.random.split(key, 4)

    x = jax.random.normal(kx, (B, T, C), dtype=jnp.float32)
    bound = 1.0 / math.sqrt(C)    # nn.Linear-style uniform(+-1/sqrt(fan_in))
    wq = jax.random.uniform(kq, (head_dim, C), jnp.float32, -bound, bound)
    wk = jax.random.uniform(kk, (head_dim, C), jnp.float32, -bound, bound)
    wv = jax.random.uniform(kv, (head_dim, C), jnp.float32, -bound, bound)

    out_ref, attn_ref = masked_head_reference(x, wq, wk, wv)

    # Precise path: fp32 MXU operands + exact reciprocal -> tight tolerance.
    out_p, attn_p = masked_head(x, wq, wk, wv, precise=True)
    jax.block_until_ready((out_p, attn_p))
    assert out_p.shape == (B, T, head_dim) and attn_p.shape == (B, T, T)
    assert jnp.allclose(out_p, out_ref, atol=1e-5, rtol=1e-5)
    assert jnp.allclose(attn_p, attn_ref, atol=1e-5, rtol=1e-5)

    # Fast path: bf16 MXU operands (fp32 accumulate) + approx reciprocal.
    out_f, attn_f = masked_head(x, wq, wk, wv, precise=False)
    jax.block_until_ready((out_f, attn_f))
    assert jnp.allclose(out_f, out_ref, atol=3e-2, rtol=3e-2)
    assert jnp.allclose(attn_f, attn_ref, atol=3e-2, rtol=3e-2)

    print("KERNEL_OK")
</pallas_src>

<mosaic_0001>
module attributes {stable_mosaic.version = 11 : i64} {
  func.func @_masked_head_kernel(%arg0: i32, %arg1: i32, %arg2: memref<1x8x64xf32, #tpu.memory_space<vmem>>, %arg3: memref<1x8x64xf32, #tpu.memory_space<vmem>>, %arg4: memref<64x128xf32, #tpu.memory_space<vmem>>, %arg5: memref<64x256xf32, #tpu.memory_space<vmem>>, %arg6: memref<1x8x128xf32, #tpu.memory_space<vmem>>, %arg7: memref<1x8x8xf32, #tpu.memory_space<vmem>>, %arg8: memref<1x8x128xf32, #tpu.memory_space<vmem>>) attributes {dimension_semantics = [#tpu.dimension_semantics<parallel>, #tpu.dimension_semantics<arbitrary>], iteration_bounds = array<i64: 2, 1>, scalar_prefetch = 0 : i64, scratch_operands = 1 : i64, tpu.core_type = #tpu.core_type<tc>, window_params = [{transform_indices = @transform_0, window_bounds = array<i64: 1, 8, 64>}, {transform_indices = @transform_1, window_bounds = array<i64: 1, 8, 64>}, {pipeline_mode = #tpu.pipeline_mode<synchronous>, transform_indices = @transform_2, window_bounds = array<i64: 64, 128>}, {pipeline_mode = #tpu.pipeline_mode<synchronous>, transform_indices = @transform_3, window_bounds = array<i64: 64, 256>}, {transform_indices = @transform_4, window_bounds = array<i64: 1, 8, 128>}, {transform_indices = @transform_5, window_bounds = array<i64: 1, 8, 8>}]} {
    %c8_i32 = arith.constant 8 : i32
    %0 = arith.muli %arg1, %c8_i32 : i32
    %c0_i32 = arith.constant 0 : i32
    %1 = arith.cmpi eq, %arg1, %c0_i32 : i32
    %2 = arith.extui %1 : i1 to i32
    %c0_i32_0 = arith.constant 0 : i32
    %3 = arith.cmpi ne, %2, %c0_i32_0 : i32
    scf.if %3 {
      %c0_20 = arith.constant 0 : index
      %c0_21 = arith.constant 0 : index
      %c0_22 = arith.constant 0 : index
      %39 = vector.load %arg2[%c0_20, %c0_21, %c0_22] : memref<1x8x64xf32, #tpu.memory_space<vmem>>, vector<1x8x64xf32>
      %40 = vector.shape_cast %39 : vector<1x8x64xf32> to vector<8x64xf32>
      %c0_23 = arith.constant 0 : index
      %c0_24 = arith.constant 0 : index
      %41 = vector.load %arg4[%c0_23, %c0_24] : memref<64x128xf32, #tpu.memory_space<vmem>>, vector<64x128xf32>
      %cst_25 = arith.constant dense<0.000000e+00> : vector<8x128xf32>
      %42 = tpu.matmul %40, %41, %cst_25 {dimension_numbers = #tpu.dot_dimension_numbers<[1], [0], [0], [1], [0, 0, 1, 1], [], []>} : vector<8x64xf32>, vector<64x128xf32>, vector<8x128xf32> -> vector<8x128xf32>
      %43 = vector.shape_cast %42 : vector<8x128xf32> to vector<1x8x128xf32>
      %c0_26 = arith.constant 0 : index
      %c0_27 = arith.constant 0 : index
      %c0_28 = arith.constant 0 : index
      %44 = vector.load %arg8[%c0_26, %c0_27, %c0_28] : memref<1x8x128xf32, #tpu.memory_space<vmem>>, vector<1x8x128xf32>
      tpu.vector_store %arg8[%c0_26, %c0_27, %c0_28], %43 {strides = array<i32>} : memref<1x8x128xf32, #tpu.memory_space<vmem>>, vector<1x8x128xf32>,
    } else {
    }
    %c0 = arith.constant 0 : index
    %c0_1 = arith.constant 0 : index
    %c0_2 = arith.constant 0 : index
    %4 = vector.load %arg3[%c0, %c0_1, %c0_2] : memref<1x8x64xf32, #tpu.memory_space<vmem>>, vector<1x8x64xf32>
    %5 = vector.shape_cast %4 : vector<1x8x64xf32> to vector<8x64xf32>
    %c0_3 = arith.constant 0 : index
    %c0_4 = arith.constant 0 : index
    %6 = vector.load %arg5[%c0_3, %c0_4] : memref<64x256xf32, #tpu.memory_space<vmem>>, vector<64x256xf32>
    %cst = arith.constant dense<0.000000e+00> : vector<8x256xf32>
    %7 = tpu.matmul %5, %6, %cst {dimension_numbers = #tpu.dot_dimension_numbers<[1], [0], [0], [1], [0, 0, 1, 1], [], []>} : vector<8x64xf32>, vector<64x256xf32>, vector<8x256xf32> -> vector<8x256xf32>
    %8 = vector.extract_strided_slice %7 {offsets = [0, 0], sizes = [8, 128], strides = [1, 1]} : vector<8x256xf32> to vector<8x128xf32>
    %9 = vector.shape_cast %8 : vector<8x128xf32> to vector<1x8x128xf32>
    %10 = vector.extract_strided_slice %7 {offsets = [0, 128], sizes = [8, 128], strides = [1, 1]} : vector<8x256xf32> to vector<8x128xf32>
    %11 = vector.shape_cast %10 : vector<8x128xf32> to vector<1x8x128xf32>
    %c0_5 = arith.constant 0 : index
    %c0_6 = arith.constant 0 : index
    %c0_7 = arith.constant 0 : index
    %12 = vector.load %arg8[%c0_5, %c0_6, %c0_7] : memref<1x8x128xf32, #tpu.memory_space<vmem>>, vector<1x8x128xf32>
    %cst_8 = arith.constant dense<0.000000e+00> : vector<1x8x8xf32>
    %13 = tpu.matmul %12, %9, %cst_8 {dimension_numbers = #tpu.dot_dimension_numbers<[2], [2], [1], [1], [0, 0, 0, 1, 1, 1], [0], [0]>} : vector<1x8x128xf32>, vector<1x8x128xf32>, vector<1x8x8xf32> -> vector<1x8x8xf32>
    %14 = tpu.iota {dimensions = array<i32: 1>} : vector<1x8x8xi32>
    %15 = tpu.iota {dimensions = array<i32: 2>} : vector<1x8x8xi32>
    %16 = vector.broadcast %0 : i32 to vector<1x8x8xi32>
    %17 = arith.addi %15, %16 : vector<1x8x8xi32>
    %18 = arith.cmpi sgt, %17, %14 : vector<1x8x8xi32>
    %cst_9 = arith.constant 0xFF800000 : f32
    %19 = vector.broadcast %cst_9 : f32 to vector<1x8x8xf32>
    %20 = arith.select %18, %19, %13 : vector<1x8x8xi1>, vector<1x8x8xf32>
    %cst_10 = arith.constant dense<0xFF800000> : vector<1x8xf32>
    %21 = vector.multi_reduction <maximumf>, %20, %cst_10 [1] : vector<1x8x8xf32> to vector<1x8xf32>
    %22 = vector.shape_cast %21 : vector<1x8xf32> to vector<1x1x8xf32>
    %23 = vector.broadcast %22 : vector<1x1x8xf32> to vector<1x8x8xf32>
    %24 = arith.subf %20, %23 : vector<1x8x8xf32>
    %25 = math.exp %24 : vector<1x8x8xf32>
    %cst_11 = arith.constant dense<0.000000e+00> : vector<1x8xf32>
    %26 = vector.multi_reduction <add>, %25, %cst_11 [1] : vector<1x8x8xf32> to vector<1x8xf32>
    %27 = vector.shape_cast %26 : vector<1x8xf32> to vector<1x1x8xf32>
    %28 = tpu.reciprocal %27 : vector<1x1x8xf32> -> vector<1x1x8xf32>
    %29 = vector.broadcast %28 : vector<1x1x8xf32> to vector<1x8x8xf32>
    %30 = arith.mulf %25, %29 : vector<1x8x8xf32>
    %c0_12 = arith.constant 0 : index
    %c0_13 = arith.constant 0 : index
    %c0_14 = arith.constant 0 : index
    %31 = vector.load %arg7[%c0_12, %c0_13, %c0_14] : memref<1x8x8xf32, #tpu.memory_space<vmem>>, vector<1x8x8xf32>
    tpu.vector_store %arg7[%c0_12, %c0_13, %c0_14], %30 {strides = array<i32>} : memref<1x8x8xf32, #tpu.memory_space<vmem>>, vector<1x8x8xf32>,
    %cst_15 = arith.constant dense<0.000000e+00> : vector<1x8x128xf32>
    %32 = tpu.matmul %30, %11, %cst_15 {dimension_numbers = #tpu.dot_dimension_numbers<[2], [1], [1], [2], [0, 0, 0, 1, 1, 2], [0], [0]>} : vector<1x8x8xf32>, vector<1x8x128xf32>, vector<1x8x128xf32> -> vector<1x8x128xf32>
    %c0_i32_16 = arith.constant 0 : i32
    %33 = arith.cmpi eq, %arg1, %c0_i32_16 : i32
    %34 = arith.extui %33 : i1 to i32
    %c0_i32_17 = arith.constant 0 : i32
    %35 = arith.cmpi ne, %34, %c0_i32_17 : i32
    scf.if %35 {
      %c0_20 = arith.constant 0 : index
      %c0_21 = arith.constant 0 : index
      %c0_22 = arith.constant 0 : index
      %39 = vector.load %arg6[%c0_20, %c0_21, %c0_22] : memref<1x8x128xf32, #tpu.memory_space<vmem>>, vector<1x8x128xf32>
      tpu.vector_store %arg6[%c0_20, %c0_21, %c0_22], %32 {strides = array<i32>} : memref<1x8x128xf32, #tpu.memory_space<vmem>>, vector<1x8x128xf32>,
    } else {
    }
    %c0_i32_18 = arith.constant 0 : i32
    %36 = arith.cmpi sgt, %arg1, %c0_i32_18 : i32
    %37 = arith.extui %36 : i1 to i32
    %c0_i32_19 = arith.constant 0 : i32
    %38 = arith.cmpi ne, %37, %c0_i32_19 : i32
    scf.if %38 {
      %c0_20 = arith.constant 0 : index
      %c0_21 = arith.constant 0 : index
      %c0_22 = arith.constant 0 : index
      %39 = vector.load %arg6[%c0_20, %c0_21, %c0_22] : memref<1x8x128xf32, #tpu.memory_space<vmem>>, vector<1x8x128xf32>
      %40 = arith.addf %39, %32 : vector<1x8x128xf32>
      %c0_23 = arith.constant 0 : index
      %c0_24 = arith.constant 0 : index
      %c0_25 = arith.constant 0 : index
      %41 = vector.load %arg6[%c0_23, %c0_24, %c0_25] : memref<1x8x128xf32, #tpu.memory_space<vmem>>, vector<1x8x128xf32>
      tpu.vector_store %arg6[%c0_23, %c0_24, %c0_25], %40 {strides = array<i32>} : memref<1x8x128xf32, #tpu.memory_space<vmem>>, vector<1x8x128xf32>,
    } else {
    }
    return
  }
  func.func @transform_0(%arg0: i32, %arg1: i32) -> (i32, i32, i32) {
    %c0_i32 = arith.constant 0 : i32
    %c0_i32_0 = arith.constant 0 : i32
    %c0_i32_1 = arith.constant 0 : i32
    return %arg0, %c0_i32, %c0_i32_0 : i32, i32, i32
  }
  func.func @transform_1(%arg0: i32, %arg1: i32) -> (i32, i32, i32) {
    %c0_i32 = arith.constant 0 : i32
    %c0_i32_0 = arith.constant 0 : i32
    return %arg0, %arg1, %c0_i32 : i32, i32, i32
  }
  func.func @transform_2(%arg0: i32, %arg1: i32) -> (i32, i32) {
    %c0_i32 = arith.constant 0 : i32
    %c0_i32_0 = arith.constant 0 : i32
    %c0_i32_1 = arith.constant 0 : i32
    return %c0_i32, %c0_i32_0 : i32, i32
  }
  func.func @transform_3(%arg0: i32, %arg1: i32) -> (i32, i32) {
    %c0_i32 = arith.constant 0 : i32
    %c0_i32_0 = arith.constant 0 : i32
    %c0_i32_1 = arith.constant 0 : i32
    return %c0_i32, %c0_i32_0 : i32, i32
  }
  func.func @transform_4(%arg0: i32, %arg1: i32) -> (i32, i32, i32) {
    %c0_i32 = arith.constant 0 : i32
    %c0_i32_0 = arith.constant 0 : i32
    %c0_i32_1 = arith.constant 0 : i32
    return %arg0, %c0_i32, %c0_i32_0 : i32, i32, i32
  }
  func.func @transform_5(%arg0: i32, %arg1: i32) -> (i32, i32, i32) {
    %c0_i32 = arith.constant 0 : i32
    %c0_i32_0 = arith.constant 0 : i32
    return %arg0, %c0_i32, %arg1 : i32, i32, i32
  }
}

</mosaic_0001>

<llo_original>
// kernel: tpu_custom_call.1
$region0: #{tpu_custom_call.1}
  #allocation0 [shape = 'u32[]', space=smem, size = 0x4, offset = 0x4, fixed_abs, tag = 'smem constant byte address 0x4 - core index']
  #allocation1 [shape = 'u32[72,128]{1,0:T(1,128)}', space=vmem, size = 0x9000, scoped, tag = 'internal scratch']
  #allocation2 [shape = 'f32[1,8,128]{2,1,0:T(8,128)}', space=vmem, size = 0x1000, scoped, tag = 'scratch operand']
  %s0 = inlined_call_operand.hbm [shape: f32[2,8,64], index: 0, kind: input, shape index: {}]
  %s1 = inlined_call_operand.hbm [shape: f32[2,8,64], index: 1, kind: input, shape index: {}]
  %s2 = inlined_call_operand.hbm [shape: f32[64,128], index: 2, kind: input, shape index: {}]
  %s3 = inlined_call_operand.hbm [shape: f32[64,256], index: 3, kind: input, shape index: {}]
  %s4 = inlined_call_operand.hbm [shape: f32[2,8,128], index: 4, kind: output, shape index: {0}]
  %s5 = inlined_call_operand.hbm [shape: f32[2,8,8], index: 5, kind: output, shape index: {1}]
  %6 = xla_tuple %s4, %s5
  %s7 = sld [smem:[#allocation0]]
  $region85: #{tpu_custom_call.1} parent=0
    _
  %s9 = ssub.s32 1, %s7
  %s10 = scalar_select 0, %s9, %s7
  $region1: #{tpu_custom_call.1} parent=0
    #allocation3 [shape = 'u8[8192]{0}', space=vmem, size = 0x2000, scoped, tag = 'input window, operand 0']
    #allocation4 [shape = 's32[2]{0}', space=sflag, size = 0x8, scoped, tag = 'scoped memory for tpu_custom_call.1']
    #allocation5 [shape = 's32[2]{0}', space=sflag, size = 0x8, scoped, tag = 'scoped memory for tpu_custom_call.1']
    #allocation6 [shape = 'u8[8192]{0}', space=vmem, size = 0x2000, scoped, tag = 'input window, operand 1']
    #allocation7 [shape = 's32[2]{0}', space=sflag, size = 0x8, scoped, tag = 'scoped memory for tpu_custom_call.1']
    #allocation8 [shape = 'u8[32768]{0}', space=vmem, size = 0x8000, scoped, tag = 'input window, operand 2, single buffered']
    #allocation9 [shape = 'u8[65536]{0}', space=vmem, size = 0x10000, scoped, tag = 'input window, operand 3, single buffered']
    #allocation10 [shape = 's32[1]{0}', space=sflag, size = 0x4, scoped, tag = 'scoped memory for tpu_custom_call.1']
    #allocation11 [shape = 'u8[8192]{0}', space=vmem, size = 0x2000, scoped, tag = 'output window, operand 0']
    #allocation12 [shape = 'u8[8192]{0}', space=vmem, size = 0x2000, scoped, tag = 'output window, operand 1']
    #allocation13 [shape = 's32[2]{0}', space=sflag, size = 0x8, scoped, tag = 'scoped memory for tpu_custom_call.1']
    %11 = vsyncpa [#allocation4], 0
    %s12 = scalar_lea.sflag [#allocation4], 1
    %13 = vsyncpa %s12, 0
    %14 = vsyncpa [#allocation7], 0
    %s15 = scalar_lea.sflag [#allocation7], 1
    %16 = vsyncpa %s15, 0
    %17 = vsyncpa [#allocation10], 0
    %18 = vsyncpa [#allocation5], 0
    %s19 = scalar_lea.sflag [#allocation5], 1
    %20 = vsyncpa %s19, 0
    %21 = vsyncpa [#allocation13], 0
    %s22 = scalar_lea.sflag [#allocation13], 1
    %23 = vsyncpa %s22, 0
    loop: start=0, step=1, limit=4
    $region2: #{tpu_custom_call.1} parent=1 // loop_pre_header
      _
    $region3: #{tpu_custom_call.1} parent=1 // loop_header
      %s25 = sphi 0, %s29
      %p26 = scmp.ge.s32.totalorder %s25, 4
      %s32 = sphi 0, %s44
      %s33 = sphi 0, %s40
      %s34 = sphi 0, %s32
      %s35 = sphi 0, %s33
      %s36 = sphi 0, %s34
      %s37 = sphi 0, %s35
      %s47 = sphi 0, %s49
      %s50 = sphi 0, %s47
      %s51 = sphi 0, %s50
      %s67 = sphi 0, %s51
      %s75 = sphi 0, %s77
      %s78 = sphi 0, %s75
      %s79 = sphi 0, %s78
      %s95 = sphi 0, %s79
      %s99 = sphi 0, %s99
      %s101 = sphi 0, %s99
      %s102 = sphi 0, %s101
      %s116 = sphi 0, %s102
      %s120 = sphi 0, %s120
      %s122 = sphi 0, %s120
      %s123 = sphi 0, %s122
      %s137 = sphi 0, %s123
      %s143 = sphi 0, %s145
      %s146 = sphi 0, %s143
      %s147 = sphi 0, %s146
      %s163 = sphi 0, %s147
      %s171 = sphi 0, %s173
      %s174 = sphi 0, %s171
      %s175 = sphi 0, %s174
      %s191 = sphi 0, %s175
    $region4: #{tpu_custom_call.1} parent=1 // loop_header_branch
      %28 = sbr.rel (%p26) target = $region8
    $region5: #{tpu_custom_call.1} parent=1 // loop_body
      %s30 = ssub.s32 %s25, 1
      %s31 = ssub.s32 %s25, 2
      %s38 = sadd.s32 1, %s33
      %p39 = scmp.ge.s32.totalorder %s38, 1
      %s40 = scalar_select %p39, 0, %s38
      %s41 = sadd.s32 1, %s32
      %s42 = scalar_select %p39, %s41, %s32
      %p43 = scmp.ge.s32.totalorder %s42, 2
      %s44 = scalar_select %p43, 0, %s42
      %s45 = ssub.s32 %s32, %s44
      %p46 = scmp.eq.s32.totalorder %s45, 0
      %s48 = sadd.s32 %s47, 1
      %s49 = scalar_select %p46, %s47, %s48
      %p52 = pneg %p46
      %p53 = scmp.eq.s32.totalorder %s25, 1
      %p54 = por %p52, %p53
      %p55 = scmp.ne.s32.totalorder %s47, %s50
      %p56 = scmp.eq.s32.totalorder %s25, 0
      %p57 = por %p55, %p56
      %p58 = scmp.ne.s32.totalorder %s47, %s50
      %p59 = scmp.eq.s32.totalorder %s30, 1
      %p60 = por %p58, %p59
      %p61 = scmp.ne.s32.totalorder %s50, %s51
      %p62 = scmp.eq.s32.totalorder %s30, 0
      %p63 = por %p61, %p62
      %p64 = scmp.ne.s32.totalorder %s50, %s51
      %p65 = scmp.eq.s32.totalorder %s31, 1
      %p66 = por %p64, %p65
      %p68 = scmp.ne.s32.totalorder %s51, %s67
      %p69 = scmp.eq.s32.totalorder %s31, 0
      %p70 = por %p68, %p69
      %s71 = ssub.s32 %s32, %s44
      %s72 = ssub.s32 %s33, %s40
      %s73 = sor.u32 %s71, %s72
      %p74 = scmp.eq.s32.totalorder %s73, 0
      %s76 = sadd.s32 %s75, 1
      %s77 = scalar_select %p74, %s75, %s76
      %p80 = pneg %p74
      %p81 = scmp.eq.s32.totalorder %s25, 1
      %p82 = por %p80, %p81
      %p83 = scmp.ne.s32.totalorder %s75, %s78
      %p84 = scmp.eq.s32.totalorder %s25, 0
      %p85 = por %p83, %p84
      %p86 = scmp.ne.s32.totalorder %s75, %s78
      %p87 = scmp.eq.s32.totalorder %s30, 1
      %p88 = por %p86, %p87
      %p89 = scmp.ne.s32.totalorder %s78, %s79
      %p90 = scmp.eq.s32.totalorder %s30, 0
      %p91 = por %p89, %p90
      %p92 = scmp.ne.s32.totalorder %s78, %s79
      %p93 = scmp.eq.s32.totalorder %s31, 1
      %p94 = por %p92, %p93
      %p96 = scmp.ne.s32.totalorder %s79, %s95
      %p97 = scmp.eq.s32.totalorder %s31, 0
      %p98 = por %p96, %p97
      %s100 = sadd.s32 %s99, 1
      %p103 = scmp.eq.s32.totalorder %s25, 1
      %p104 = scmp.ne.s32.totalorder %s99, %s101
      %p105 = scmp.eq.s32.totalorder %s25, 0
      %p106 = por %p104, %p105
      %p107 = scmp.ne.s32.totalorder %s99, %s101
      %p108 = scmp.eq.s32.totalorder %s30, 1
      %p109 = por %p107, %p108
      %p110 = scmp.ne.s32.totalorder %s101, %s102
      %p111 = scmp.eq.s32.totalorder %s30, 0
      %p112 = por %p110, %p111
      %p113 = scmp.ne.s32.totalorder %s101, %s102
      %p114 = scmp.eq.s32.totalorder %s31, 1
      %p115 = por %p113, %p114
      %p117 = scmp.ne.s32.totalorder %s102, %s116
      %p118 = scmp.eq.s32.totalorder %s31, 0
      %p119 = por %p117, %p118
      %s121 = sadd.s32 %s120, 1
      %p124 = scmp.eq.s32.totalorder %s25, 1
      %p125 = scmp.ne.s32.totalorder %s120, %s122
      %p126 = scmp.eq.s32.totalorder %s25, 0
      %p127 = por %p125, %p126
      %p128 = scmp.ne.s32.totalorder %s120, %s122
      %p129 = scmp.eq.s32.totalorder %s30, 1
      %p130 = por %p128, %p129
      %p131 = scmp.ne.s32.totalorder %s122, %s123
      %p132 = scmp.eq.s32.totalorder %s30, 0
      %p133 = por %p131, %p132
      %p134 = scmp.ne.s32.totalorder %s122, %s123
      %p135 = scmp.eq.s32.totalorder %s31, 1
      %p136 = por %p134, %p135
      %p138 = scmp.ne.s32.totalorder %s123, %s137
      %p139 = scmp.eq.s32.totalorder %s31, 0
      %p140 = por %p138, %p139
      %s141 = ssub.s32 %s32, %s44
      %p142 = scmp.eq.s32.totalorder %s141, 0
      %s144 = sadd.s32 %s143, 1
      %s145 = scalar_select %p142, %s143, %s144
      %p148 = pneg %p142
      %p149 = scmp.eq.s32.totalorder %s25, 1
      %p150 = por %p148, %p149
      %p151 = scmp.ne.s32.totalorder %s143, %s146
      %p152 = scmp.eq.s32.totalorder %s25, 0
      %p153 = por %p151, %p152
      %p154 = scmp.ne.s32.totalorder %s143, %s146
      %p155 = scmp.eq.s32.totalorder %s30, 1
      %p156 = por %p154, %p155
      %p157 = scmp.ne.s32.totalorder %s146, %s147
      %p158 = scmp.eq.s32.totalorder %s30, 0
      %p159 = por %p157, %p158
      %p160 = scmp.ne.s32.totalorder %s146, %s147
      %p161 = scmp.eq.s32.totalorder %s31, 1
      %p162 = por %p160, %p161
      %p164 = scmp.ne.s32.totalorder %s147, %s163
      %p165 = scmp.eq.s32.totalorder %s31, 0
      %p166 = por %p164, %p165
      %s167 = ssub.s32 %s32, %s44
      %s168 = ssub.s32 %s33, %s40
      %s169 = sor.u32 %s167, %s168
      %p170 = scmp.eq.s32.totalorder %s169, 0
      %s172 = sadd.s32 %s171, 1
      %s173 = scalar_select %p170, %s171, %s172
      %p176 = pneg %p170
      %p177 = scmp.eq.s32.totalorder %s25, 1
      %p178 = por %p176, %p177
      %p179 = scmp.ne.s32.totalorder %s171, %s174
      %p180 = scmp.eq.s32.totalorder %s25, 0
      %p181 = por %p179, %p180
      %p182 = scmp.ne.s32.totalorder %s171, %s174
      %p183 = scmp.eq.s32.totalorder %s30, 1
      %p184 = por %p182, %p183
      %p185 = scmp.ne.s32.totalorder %s174, %s175
      %p186 = scmp.eq.s32.totalorder %s30, 0
      %p187 = por %p185, %p186
      %p188 = scmp.ne.s32.totalorder %s174, %s175
      %p189 = scmp.eq.s32.totalorder %s31, 1
      %p190 = por %p188, %p189
      %p192 = scmp.ne.s32.totalorder %s175, %s191
      %p193 = scmp.eq.s32.totalorder %s31, 0
      %p194 = por %p192, %p193
      %p195 = scmp.le.s32.totalorder 1, %s25
      %p196 = scmp.lt.s32.totalorder %s25, 3
      %p197 = pnand %p195, %p196
      %p198 = pneg %p197
      // Predicated region
      $region9: #{tpu_custom_call.1} parent=5 // pred_check
        _
      $region10: #{tpu_custom_call.1} parent=5 // pred_check_branch
        %200 = sbr.rel (%p197) target = $region12
      $region11: #{tpu_custom_call.1} parent=5 // pred_region
        %s201 = ssub.s32 %s25, 1
        // Predicated region
        $region13: #{tpu_custom_call.1} parent=11 // pred_check
          %p202 = pneg %p112
        $region14: #{tpu_custom_call.1} parent=11 // pred_check_branch
          %204 = sbr.rel (%p202) target = $region16
        $region15: #{tpu_custom_call.1} parent=11 // pred_region
          %206 = vsyncadd [#allocation7], 0
          %s207 = sshll.u32 %s2, 4
          %s208 = int_to_ptr.hbm [resolvable:$true] %s207
          %s209 = sshll.u32 [#allocation8], 4
          %s210 = int_to_ptr.vmem [resolvable:$true] %s209
          %215 = dma.hbm_to_vmem [thread:$0]  %s208, 1024, %s210, [#allocation7], 128, 128, 8
        $region16: #{tpu_custom_call.1} parent=11 // pred_fallthru
          _
        // Predicated region
        $region17: #{tpu_custom_call.1} parent=11 // pred_check
          %p216 = pneg %p133
        $region18: #{tpu_custom_call.1} parent=11 // pred_check_branch
          %218 = sbr.rel (%p216) target = $region20
        $region19: #{tpu_custom_call.1} parent=11 // pred_region
          %220 = vsyncadd [#allocation10], 0
          %s221 = sshll.u32 %s3, 4
          %s222 = int_to_ptr.hbm [resolvable:$true] %s221
          %s223 = sshll.u32 [#allocation9], 4
          %s224 = int_to_ptr.vmem [resolvable:$true] %s223
          %229 = dma.hbm_to_vmem [thread:$0]  %s222, 2048, %s224, [#allocation10], 256, 256, 16
        $region20: #{tpu_custom_call.1} parent=11 // pred_fallthru
          _
      $region12: #{tpu_custom_call.1} parent=5 // pred_fallthru
        _
      %p230 = scmp.lt.s32.totalorder %s25, 2
      // Predicated region
      $region21: #{tpu_custom_call.1} parent=5 // pred_check
        %p231 = pneg %p230
      $region22: #{tpu_custom_call.1} parent=5 // pred_check_branch
        %233 = sbr.rel (%p231) target = $region24
      $region23: #{tpu_custom_call.1} parent=5 // pred_region
        // Predicated region
        $region25: #{tpu_custom_call.1} parent=23 // pred_check
          %p234 = pneg %p57
        $region26: #{tpu_custom_call.1} parent=23 // pred_check_branch
          %236 = sbr.rel (%p234) target = $region28
        $region27: #{tpu_custom_call.1} parent=23 // pred_region
          %s237 = sand.u32 %s47, 1
          %s238 = scalar_lea.sflag [#allocation4], %s237
          %s239 = sand.u32 %s47, 1
          %s240 = smul.addr %s239, 8
          %s241 = scalar_lea.vmem [#allocation3], %s240
          %243 = vsyncadd %s238, 0
          %s244 = smul.addr %s32, 8
          %s245 = scalar_lea.hbm %s0, %s244
          %s247 = sshll.u32 %s245, 4
          %s248 = int_to_ptr.hbm [resolvable:$true] %s247
          %s249 = sshll.u32 %s241, 4
          %s250 = int_to_ptr.vmem [resolvable:$true] %s249
          %252 = dma.hbm_to_vmem [thread:$0]  %s248, 128, %s250, %s238
        $region28: #{tpu_custom_call.1} parent=23 // pred_fallthru
          _
        // Predicated region
        $region29: #{tpu_custom_call.1} parent=23 // pred_check
          %p253 = pneg %p85
        $region30: #{tpu_custom_call.1} parent=23 // pred_check_branch
          %255 = sbr.rel (%p253) target = $region32
        $region31: #{tpu_custom_call.1} parent=23 // pred_region
          %s256 = sand.u32 %s25, 1
          %s257 = scalar_lea.sflag [#allocation7], %s256
          %s258 = sand.u32 %s75, 1
          %s259 = smul.addr %s258, 8
          %s260 = scalar_lea.vmem [#allocation6], %s259
          %262 = vsyncadd %s257, 0
          %s263 = sadd.s32 %s33, %s32
          %s264 = smul.addr %s263, 8
          %s265 = scalar_lea.hbm %s1, %s264
          %s267 = sshll.u32 %s265, 4
          %s268 = int_to_ptr.hbm [resolvable:$true] %s267
          %s269 = sshll.u32 %s260, 4
          %s270 = int_to_ptr.vmem [resolvable:$true] %s269
          %272 = dma.hbm_to_vmem [thread:$0]  %s268, 128, %s270, %s257
        $region32: #{tpu_custom_call.1} parent=23 // pred_fallthru
          _
      $region24: #{tpu_custom_call.1} parent=5 // pred_fallthru
        _
      %p273 = scmp.le.s32.totalorder 1, %s25
      %p274 = scmp.lt.s32.totalorder %s25, 3
      %p275 = pnand %p273, %p274
      %p276 = pneg %p275
      // Predicated region
      $region33: #{tpu_custom_call.1} parent=5 // pred_check
        _
      $region34: #{tpu_custom_call.1} parent=5 // pred_check_branch
        %278 = sbr.rel (%p275) target = $region36
      $region35: #{tpu_custom_call.1} parent=5 // pred_region
        %s279 = ssub.s32 %s25, 1
        %s280 = sand.u32 %s50, 1
        %s281 = scalar_lea.sflag [#allocation4], %s280
        %s282 = sand.u32 %s50, 1
        %s283 = smul.addr %s282, 8
        %s284 = scalar_lea.vmem [#allocation3], %s283
        // Predicated region
        $region37: #{tpu_custom_call.1} parent=35 // pred_check
          %p285 = pneg %p63
        $region38: #{tpu_custom_call.1} parent=35 // pred_check_branch
          %287 = sbr.rel (%p285) target = $region40
        $region39: #{tpu_custom_call.1} parent=35 // pred_region
          %289 = dma.done %s281, 128
        $region40: #{tpu_custom_call.1} parent=35 // pred_fallthru
          _
        %s290 = sand.u32 %s30, 1
        %s291 = scalar_lea.sflag [#allocation7], %s290
        %s292 = sand.u32 %s78, 1
        %s293 = smul.addr %s292, 8
        %s294 = scalar_lea.vmem [#allocation6], %s293
        // Predicated region
        $region41: #{tpu_custom_call.1} parent=35 // pred_check
          %p295 = pneg %p91
        $region42: #{tpu_custom_call.1} parent=35 // pred_check_branch
          %297 = sbr.rel (%p295) target = $region44
        $region43: #{tpu_custom_call.1} parent=35 // pred_region
          %299 = dma.done %s291, 128
        $region44: #{tpu_custom_call.1} parent=35 // pred_fallthru
          _
        // Predicated region
        $region45: #{tpu_custom_call.1} parent=35 // pred_check
          %p300 = pneg %p112
        $region46: #{tpu_custom_call.1} parent=35 // pred_check_branch
          %302 = sbr.rel (%p300) target = $region48
        $region47: #{tpu_custom_call.1} parent=35 // pred_region
          %304 = dma.done [#allocation7], 1024
        $region48: #{tpu_custom_call.1} parent=35 // pred_fallthru
          _
        // Predicated region
        $region49: #{tpu_custom_call.1} parent=35 // pred_check
          %p305 = pneg %p133
        $region50: #{tpu_custom_call.1} parent=35 // pred_check_branch
          %307 = sbr.rel (%p305) target = $region52
        $region51: #{tpu_custom_call.1} parent=35 // pred_region
          %309 = dma.done [#allocation10], 2048
        $region52: #{tpu_custom_call.1} parent=35 // pred_fallthru
          _
        %s310 = sand.u32 %s50, 1
        %s311 = scalar_lea.sflag [#allocation4], %s310
        %s312 = sand.u32 %s50, 1
        %s313 = smul.addr %s312, 8
        %s314 = scalar_lea.vmem [#allocation3], %s313
        %p315 = pneg %p63
        %p316 = pneg %p60
        %s317 = sand.u32 %s30, 1
        %s318 = scalar_lea.sflag [#allocation7], %s317
        %s319 = sand.u32 %s78, 1
        %s320 = smul.addr %s319, 8
        %s321 = scalar_lea.vmem [#allocation6], %s320
        %p322 = pneg %p91
        %p323 = pneg %p88
        %p324 = pneg %p112
        %p325 = pneg %p109
        %p326 = pneg %p133
        %p327 = pneg %p130
        %p328 = pneg %p159
        %p329 = pneg %p156
        %s330 = sand.u32 %s146, 1
        %s331 = scalar_lea.sflag [#allocation5], %s330
        %s332 = sand.u32 %s146, 1
        %s333 = smul.addr %s332, 8
        %s334 = scalar_lea.vmem [#allocation11], %s333
        %p335 = pneg %p187
        %p336 = pneg %p184
        %s337 = sand.u32 %s174, 1
        %s338 = scalar_lea.sflag [#allocation13], %s337
        %s339 = sand.u32 %s174, 1
        %s340 = smul.addr %s339, 8
        %s341 = scalar_lea.vmem [#allocation12], %s340
        %s342 = smul.u32 %s35, 8
        %p343 = scmp.eq.s32.totalorder %s35, 0
        // Predicated region
        $region53: #{tpu_custom_call.1} parent=35 // pred_check
          %p344 = pneg %p343
        $region54: #{tpu_custom_call.1} parent=35 // pred_check_branch
          %346 = sbr.rel (%p344) target = $region56
        $region55: #{tpu_custom_call.1} parent=35 // pred_region
          %v347 = vld [vmem:[%s284] sm:$0xff]
          %v348 = vld [vmem:[#allocation8] sm:$0xff]
          %v349 = vld [vmem:[#allocation8 + $0x8] sm:$0xff]
          %v350 = vld [vmem:[#allocation8 + $0x10] sm:$0xff]
          %v351 = vld [vmem:[#allocation8 + $0x18] sm:$0xff]
          %v352 = vld [vmem:[#allocation8 + $0x20] sm:$0xff]
          %v353 = vld [vmem:[#allocation8 + $0x28] sm:$0xff]
          %v354 = vld [vmem:[#allocation8 + $0x30] sm:$0xff]
          %v355 = vld [vmem:[#allocation8 + $0x38] sm:$0xff]
          %vm356 = vcmask 523264
          %v358 = vsel %vm356, %v347, 0
          %360 = vmatpush.msra.mxu0 0.0
          %361 = vmatpush.msra.mxu0 0.0
          %362 = vmatpush.msra.mxu0 0.0
          %363 = vmatpush.msra.mxu0 0.0
          %364 = vmatpush.msra.mxu0 0.0
          %365 = vmatpush.msra.mxu0 0.0
          %366 = vmatpush.msra.mxu0 0.0
          %367 = vmatpush.msra.mxu0 0.0
          %368 = vmatpush.msra.mxu0 %v355
          %369 = vmatpush.msra.mxu0 %v354
          %370 = vmatpush.msra.mxu0 %v353
          %371 = vmatpush.msra.mxu0 %v352
          %372 = vmatpush.msra.mxu0 %v351
          %373 = vmatpush.msra.mxu0 %v350
          %374 = vmatpush.msra.mxu0 %v349
          %375 = vmatpush.msra.mxu0 %v348
          %376 = vmatmul.f32.gmra.mxu0 %v358
          %v377 = vpop.f32.mrf.mxu0
          %v378 = vadd.f32 0.0, %v377
          %379 = vdwg.mxu0
          %380 = vst [vmem:[#allocation2] sm:$0xff] %v378
        $region56: #{tpu_custom_call.1} parent=35 // pred_fallthru
          _
        %v381 = vld [vmem:[%s294] sm:$0xff]
        %v382 = vld [vmem:[#allocation9] sm:$0xff]
        %v383 = vld [vmem:[#allocation9 + $0x8] sm:$0xff]
        %v384 = vld [vmem:[#allocation9 + $0x10] sm:$0xff]
        %v385 = vld [vmem:[#allocation9 + $0x18] sm:$0xff]
        %v386 = vld [vmem:[#allocation9 + $0x20] sm:$0xff]
        %v387 = vld [vmem:[#allocation9 + $0x28] sm:$0xff]
        %v388 = vld [vmem:[#allocation9 + $0x30] sm:$0xff]
        %v389 = vld [vmem:[#allocation9 + $0x38] sm:$0xff]
        %v390 = vld [vmem:[#allocation9 + $0x40] sm:$0xff]
        %v391 = vld [vmem:[#allocation9 + $0x48] sm:$0xff]
        %v392 = vld [vmem:[#allocation9 + $0x50] sm:$0xff]
        %v393 = vld [vmem:[#allocation9 + $0x58] sm:$0xff]
        %v394 = vld [vmem:[#allocation9 + $0x60] sm:$0xff]
        %v395 = vld [vmem:[#allocation9 + $0x68] sm:$0xff]
        %v396 = vld [vmem:[#allocation9 + $0x70] sm:$0xff]
        %v397 = vld [vmem:[#allocation9 + $0x78] sm:$0xff]
        %vm398 = vcmask 523264
        %v400 = vsel %vm398, %v381, 0
        %402 = vmatpush.msra.mxu0 0.0
        %403 = vmatpush.msra.mxu0 0.0
        %404 = vmatpush.msra.mxu0 0.0
        %405 = vmatpush.msra.mxu0 0.0
        %406 = vmatpush.msra.mxu0 0.0
        %407 = vmatpush.msra.mxu0 0.0
        %408 = vmatpush.msra.mxu0 0.0
        %409 = vmatpush.msra.mxu0 0.0
        %410 = vmatpush.msra.mxu0 %v396
        %411 = vmatpush.msra.mxu0 %v394
        %412 = vmatpush.msra.mxu0 %v392
        %413 = vmatpush.msra.mxu0 %v390
        %414 = vmatpush.msra.mxu0 %v388
        %415 = vmatpush.msra.mxu0 %v386
        %416 = vmatpush.msra.mxu0 %v384
        %417 = vmatpush.msra.mxu0 %v382
        %418 = vmatmul.f32.gmra.mxu0 %v400
        %v419 = vpop.f32.mrf.mxu0
        %v420 = vadd.f32 0.0, %v419
        %421 = vdwg.mxu0
        %422 = vmatpush.msra.mxu0 0.0
        %423 = vmatpush.msra.mxu0 0.0
        %424 = vmatpush.msra.mxu0 0.0
        %425 = vmatpush.msra.mxu0 0.0
        %426 = vmatpush.msra.mxu0 0.0
        %427 = vmatpush.msra.mxu0 0.0
        %428 = vmatpush.msra.mxu0 0.0
        %429 = vmatpush.msra.mxu0 0.0
        %430 = vmatpush.msra.mxu0 %v397
        %431 = vmatpush.msra.mxu0 %v395
        %432 = vmatpush.msra.mxu0 %v393
        %433 = vmatpush.msra.mxu0 %v391
        %434 = vmatpush.msra.mxu0 %v389
        %435 = vmatpush.msra.mxu0 %v387
        %436 = vmatpush.msra.mxu0 %v385
        %437 = vmatpush.msra.mxu0 %v383
        %438 = vmatmul.f32.gmra.mxu0 %v400
        %v439 = vpop.f32.mrf.mxu0
        %v440 = vadd.f32 0.0, %v439
        %441 = vdwg.mxu0
        %v442 = vld [vmem:[#allocation2] sm:$0xff]
        %443 = vmatpush.xpose.msra.mxu0 0.0
        %444 = vmatpush.xpose.msra.mxu0 0.0
        %445 = vmatpush.xpose.msra.mxu0 0.0
        %446 = vmatpush.xpose.msra.mxu0 0.0
        %447 = vmatpush.xpose.msra.mxu0 0.0
        %448 = vmatpush.xpose.msra.mxu0 0.0
        %449 = vmatpush.xpose.msra.mxu0 0.0
        %450 = vmatpush.xpose.msra.mxu0 0.0
        %451 = vmatpush.xpose.msra.mxu0 0.0
        %452 = vmatpush.xpose.msra.mxu0 0.0
        %453 = vmatpush.xpose.msra.mxu0 0.0
        %454 = vmatpush.xpose.msra.mxu0 0.0
        %455 = vmatpush.xpose.msra.mxu0 0.0
        %456 = vmatpush.xpose.msra.mxu0 0.0
        %457 = vmatpush.xpose.msra.mxu0 0.0
        %458 = vmatpush.xpose.msra.mxu0 %v420
        %459 = vmatmul.f32.gmra.mxu0 %v442
        %v460 = vpop.f32.mrf.mxu0
        %v461 = vadd.f32 0.0, %v460
        %462 = vdwg.mxu0
        %v463 = vlaneseq
        %v464 = vshrl.u32 %v463, 7
        %v465 = vlaneseq
        %v466 = vand.u32 %v465, 127
        %v467 = vstv %s342
        %v468 = vadd.s32 %v466, %v467
        %vm469 = vcmp.gt.s32.totalorder %v468, %v464
        %v470 = vsel %vm469, -inf, %v461
        %vm471 = vcmask 64512
        %v472 = vsel %vm471, %v470, -inf
        %v473 = vrot.slane %v472, 4
        %v474 = vmax.f32 %v472, %v473
        %v475 = vrot.slane %v474, 2
        %v476 = vmax.f32 %v474, %v475
        %v477 = vrot.slane %v476, 1
        %v478 = vmax.f32 %v476, %v477
        %v479 = vsub.f32 %v470, %v478
        %v480 = vmul.f32 %v479, 1.442695
        %v481 = vpow.pop %v480
        %v482 = vsel %vm471, %v481, 0.0
        %v483 = vrot.slane %v482, 4
        %v484 = vadd.f32 %v482, %v483
        %v485 = vrot.slane %v484, 2
        %v486 = vadd.f32 %v484, %v485
        %v487 = vrot.slane %v486, 1
        %v488 = vadd.f32 %v486, %v487
        %v489 = vrcp.pop %v488
        %v490 = vmul.f32 %v488, %v489
        %v491 = vsub.f32 1.0, %v490
        %v492 = vmul.f32 %v489, %v491
        %v493 = vadd.f32 %v489, %v492
        %vm494 = vweird.f32 %v488
        %vm495 = vweird.f32 %v489
        %vm496 = vmor %vm494, %vm495
        %v497 = vsel %vm496, %v489, %v493
        %v498 = vand.u32 2147483647, %v488
        %vm499 = vcmp.eq.f32.partialorder %v498, 8.507059e+37
        %v500 = vand.u32 %v488, 2147483648
        %v501 = vor.u32 1.1754944e-38, %v500
        %v502 = vsel %vm499, %v501, %v497
        %v503 = vmul.f32 %v481, %v502
        %504 = vst.msk [vmem:[%s341] sm:$0xff] %vm471, %v503
        %v506 = vsel %vm471, %v503, 0
        %508 = vmatpush.msra.mxu0 0.0
        %509 = vmatpush.msra.mxu0 0.0
        %510 = vmatpush.msra.mxu0 0.0
        %511 = vmatpush.msra.mxu0 0.0
        %512 = vmatpush.msra.mxu0 0.0
        %513 = vmatpush.msra.mxu0 0.0
        %514 = vmatpush.msra.mxu0 0.0
        %515 = vmatpush.msra.mxu0 0.0
        %516 = vmatpush.msra.mxu0 0.0
        %517 = vmatpush.msra.mxu0 0.0
        %518 = vmatpush.msra.mxu0 0.0
        %519 = vmatpush.msra.mxu0 0.0
        %520 = vmatpush.msra.mxu0 0.0
        %521 = vmatpush.msra.mxu0 0.0
        %522 = vmatpush.msra.mxu0 0.0
        %523 = vmatpush.msra.mxu0 %v440
        %524 = vmatmul.f32.gmra.mxu0 %v506
        %v525 = vpop.f32.mrf.mxu0
        %v526 = vadd.f32 0.0, %v525
        %527 = vdwg.mxu0
        // Predicated region
        $region57: #{tpu_custom_call.1} parent=35 // pred_check
          %p528 = pneg %p343
        $region58: #{tpu_custom_call.1} parent=35 // pred_check_branch
          %530 = sbr.rel (%p528) target = $region60
        $region59: #{tpu_custom_call.1} parent=35 // pred_region
          %531 = vst [vmem:[%s334] sm:$0xff] %v526
        $region60: #{tpu_custom_call.1} parent=35 // pred_fallthru
          _
        %p532 = scmp.gt.s32.totalorder %s35, 0
        // Predicated region
        $region61: #{tpu_custom_call.1} parent=35 // pred_check
          %p533 = pneg %p532
        $region62: #{tpu_custom_call.1} parent=35 // pred_check_branch
          %535 = sbr.rel (%p533) target = $region64
        $region63: #{tpu_custom_call.1} parent=35 // pred_region
          %v536 = vld [vmem:[%s334] sm:$0xff]
          %v537 = vadd.f32 %v536, %v526
          %538 = vst [vmem:[%s334] sm:$0xff] %v537
        $region64: #{tpu_custom_call.1} parent=35 // pred_fallthru
          _
        %s539 = sand.u32 %s146, 1
        %s540 = scalar_lea.sflag [#allocation5], %s539
        %s541 = sand.u32 %s146, 1
        %s542 = smul.addr %s541, 8
        %s543 = scalar_lea.vmem [#allocation11], %s542
        %s544 = sand.u32 %s174, 1
        %s545 = scalar_lea.sflag [#allocation13], %s544
        %s546 = sand.u32 %s174, 1
        %s547 = smul.addr %s546, 8
        %s548 = scalar_lea.vmem [#allocation12], %s547
        // Predicated region
        $region65: #{tpu_custom_call.1} parent=35 // pred_check
          %p549 = pneg %p156
        $region66: #{tpu_custom_call.1} parent=35 // pred_check_branch
          %551 = sbr.rel (%p549) target = $region68
        $region67: #{tpu_custom_call.1} parent=35 // pred_region
          %553 = vsyncadd %s540, 0
          %s554 = smul.addr %s34, 8
          %s555 = scalar_lea.hbm %s4, %s554
          %s557 = sshll.u32 %s543, 4
          %s558 = int_to_ptr.vmem [resolvable:$true] %s557
          %s559 = sshll.u32 %s555, 4
          %s560 = int_to_ptr.hbm [resolvable:$true] %s559
          %562 = dma.vmem_to_hbm [thread:$0]  %s558, 128, %s560, %s540
        $region68: #{tpu_custom_call.1} parent=35 // pred_fallthru
          _
        // Predicated region
        $region69: #{tpu_custom_call.1} parent=35 // pred_check
          %p563 = pneg %p184
        $region70: #{tpu_custom_call.1} parent=35 // pred_check_branch
          %565 = sbr.rel (%p563) target = $region72
        $region71: #{tpu_custom_call.1} parent=35 // pred_region
          %567 = vsyncadd %s545, 0
          %s568 = sadd.s32 %s35, %s34
          %s569 = smul.addr %s568, 8
          %s570 = scalar_lea.hbm %s5, %s569
          %s572 = sshll.u32 %s548, 4
          %s573 = int_to_ptr.vmem [resolvable:$true] %s572
          %s574 = sshll.u32 %s570, 4
          %s575 = int_to_ptr.hbm [resolvable:$true] %s574
          %577 = dma.vmem_to_hbm [thread:$0]  %s573, 128, %s575, %s545
        $region72: #{tpu_custom_call.1} parent=35 // pred_fallthru
          _
      $region36: #{tpu_custom_call.1} parent=5 // pred_fallthru
        _
      %p578 = scmp.le.s32.totalorder 2, %s25
      // Predicated region
      $region73: #{tpu_custom_call.1} parent=5 // pred_check
        %p579 = pneg %p578
      $region74: #{tpu_custom_call.1} parent=5 // pred_check_branch
        %581 = sbr.rel (%p579) target = $region76
      $region75: #{tpu_custom_call.1} parent=5 // pred_region
        %s582 = ssub.s32 %s25, 2
        // Predicated region
        $region77: #{tpu_custom_call.1} parent=75 // pred_check
          %p583 = pneg %p162
        $region78: #{tpu_custom_call.1} parent=75 // pred_check_branch
          %585 = sbr.rel (%p583) target = $region80
        $region79: #{tpu_custom_call.1} parent=75 // pred_region
          %s586 = sand.u32 %s147, 1
          %s587 = scalar_lea.sflag [#allocation5], %s586
          %s588 = sand.u32 %s147, 1
          %s589 = smul.addr %s588, 8
          %s590 = scalar_lea.vmem [#allocation11], %s589
          %592 = dma.done %s587, 128
        $region80: #{tpu_custom_call.1} parent=75 // pred_fallthru
          _
        // Predicated region
        $region81: #{tpu_custom_call.1} parent=75 // pred_check
          %p593 = pneg %p190
        $region82: #{tpu_custom_call.1} parent=75 // pred_check_branch
          %595 = sbr.rel (%p593) target = $region84
        $region83: #{tpu_custom_call.1} parent=75 // pred_region
          %s596 = sand.u32 %s175, 1
          %s597 = scalar_lea.sflag [#allocation13], %s596
          %s598 = sand.u32 %s175, 1
          %s599 = smul.addr %s598, 8
          %s600 = scalar_lea.vmem [#allocation12], %s599
          %602 = dma.done %s597, 128
        $region84: #{tpu_custom_call.1} parent=75 // pred_fallthru
          _
      $region76: #{tpu_custom_call.1} parent=5 // pred_fallthru
        _
    $region6: #{tpu_custom_call.1} parent=1 // loop_footer
      %s29 = sadd.s32 1, %s25
    $region7: #{tpu_custom_call.1} parent=1 // loop_footer_branch
      %24 = sbr.rel target = $region3
    $region8: #{tpu_custom_call.1} parent=1 // loop_exit
      _
    %603 = vsyncpa [#allocation4], 1
    %s604 = scalar_lea.sflag [#allocation4], 1
    %605 = vsyncpa %s604, 1
    %606 = vsyncpa [#allocation7], 1
    %s607 = scalar_lea.sflag [#allocation7], 1
    %608 = vsyncpa %s607, 1
    %609 = vsyncpa [#allocation10], 1
    %610 = vsyncpa [#allocation5], 1
    %s611 = scalar_lea.sflag [#allocation5], 1
    %612 = vsyncpa %s611, 1
    %613 = vsyncpa [#allocation13], 1
    %s614 = scalar_lea.sflag [#allocation13], 1
    %615 = vsyncpa %s614, 1

</llo_original>
